<compile_context>
chip_gen: v7x
topology: tpu7x:2x2x1
jax: 0.10.0
libtpu: 0.0.40
codegen_flags: <defaults>
</compile_context>

<pallas_src>
import jax
import jax.numpy as jnp
from jax.experimental import pallas as pl
from jax.experimental.pallas import tpu as pltpu


def _make_prefix_kernel(pd: int, reps: int, aligned: bool):
    """pd = prefix_length * D_h, reps = row_block // h (all static)."""

    def prefix_kernel(kp_ref, vp_ref, k_ref, v_ref, nk_ref, nv_ref):
        # kp_ref / vp_ref : (h, pd)              tiny prefix, VMEM-resident (constant index_map)
        # k_ref  / v_ref  : (row_block, sd)      current row block of key / value
        # nk_ref / nv_ref : (row_block, pd + sd) outputs
        kp = kp_ref[...]
        vp = vp_ref[...]
        if reps > 1:
            # Replicate the per-head prefix down the sublane axis to match the
            # (B, h)-flattened row order of this block (row i -> head i % h).
            kp = jnp.tile(kp, (reps, 1))
            vp = jnp.tile(vp, (reps, 1))
        if aligned:
            # pd % 128 == 0: both split stores are lane-aligned and unmasked.
            nk_ref[:, :pd] = kp
            nk_ref[:, pd:] = k_ref[...]
            nv_ref[:, :pd] = vp
            nv_ref[:, pd:] = v_ref[...]
        else:
            # Misaligned boundary: build the whole row in VMEM and do ONE full-width
            # store per output, avoiding XLU lane-rotates + masked vst on the big copy.
            nk_ref[...] = jnp.concatenate([kp, k_ref[...]], axis=-1)
            nv_ref[...] = jnp.concatenate([vp, v_ref[...]], axis=-1)

    return prefix_kernel


def _sublane_multiple(itemsize: int) -> int:
    # Sub-32-bit dtypes pack 2/4 rows per sublane; require full packed groups.
    return max(8, 32 // max(1, itemsize))


def _choose_row_block(B, h, S, D_h, P, itemsize, vmem_budget_bytes):
    """Row block: multiple of h, divides B*h, and (== B*h or multiple of packing factor)."""
    rows = B * h
    sd = S * D_h
    pd = P * D_h
    od = pd + sd
    # Per-row VMEM: double-buffered K/V input + output blocks, plus roughly one
    # transient concat value (and tiled prefix) per output in vregs / scratch.
    per_row = itemsize * (2 * 2 * sd + 2 * 2 * od + 2 * (od + pd))
    max_rows = max(1, vmem_budget_bytes // per_row)

    sub = _sublane_multiple(itemsize)
    valid = []
    for b in range(1, B + 1):
        if B % b:
            continue
        rb = h * b
        if rb == rows or rb % sub == 0:      # (8,128)-rule on the row axis, dtype-aware
            valid.append(rb)
    valid.sort()

    fitting = [rb for rb in valid if rb <= max_rows]
    if not fitting:
        # TODO(synk): add an sd-chunking grid axis for very large S*D_h where even the
        # smallest legal row block blows the VMEM budget (matters most on v7x 64 MiB).
        return valid[0]
    # Prefer the largest block that still gives >=2 grid steps so the "parallel" axis
    # can shard across both v7x TensorCores; costs only ~0.35us/step on 1-TC chips.
    multi = [rb for rb in fitting if rows // rb >= 2]
    return multi[-1] if multi else fitting[-1]


def prefix_forward(key, value, key_prefix, value_prefix, prefix_length):
    """Equivalent of Prefix.forward((key, value)).

    key, value:               (B, h, S, D_h)
    key_prefix, value_prefix: flat (prefix_length * h * D_h,)
    returns (new_key, new_value): (B, h, prefix_length + S, D_h)
    """
    B, h, S, D_h = key.shape
    P = prefix_length
    assert key_prefix.size == P * h * D_h
    assert value_prefix.size == P * h * D_h

    sd = S * D_h
    pd = P * D_h
    od = pd + sd
    rows = B * h
    k_dtype = key.dtype
    v_dtype = value.dtype
    itemsize = jnp.dtype(k_dtype).itemsize

    # Generation-aware VMEM sizing (v7x: 64 MiB/TC; v5e/v6e: 128 MiB).
    try:
        vmem_cap = int(pltpu.get_tpu_info().vmem_capacity_bytes)
    except Exception:
        vmem_cap = 64 << 20  # conservative default (v7x per-TC VMEM)
    vmem_ceiling = max(32 << 20, min(vmem_cap - (16 << 20), 100 << 20))
    vmem_budget = int(vmem_ceiling * 0.55)

    row_block = _choose_row_block(B, h, S, D_h, P, itemsize, vmem_budget)
    reps = row_block // h
    grid = (rows // row_block,)

    # Free (contiguous) reshapes to lane-dense 2-D layouts.
    k2d = key.reshape(rows, sd)
    v2d = value.reshape(rows, sd)
    # Flat parameter is head-major (h, P, D_h) -> (h, pd).  Not tiled in HBM; the
    # kernel replicates it to (row_block, pd) in VMEM.
    kp2d = key_prefix.reshape(h, pd).astype(k_dtype)
    vp2d = value_prefix.reshape(h, pd).astype(v_dtype)

    kernel = _make_prefix_kernel(pd, reps, aligned=(pd % 128 == 0))

    # Scoped VMEM estimate: double-buffered K/V I/O blocks + transient concat values
    # + tiny resident prefix blocks, with 25% + 2 MiB headroom, clamped below physical.
    est = itemsize * row_block * (2 * 2 * sd + 2 * 2 * od + 2 * (od + pd))
    est += 4 * h * pd * itemsize
    vmem_limit = int(min(max(est + est // 4 + (2 << 20), 32 << 20), vmem_ceiling))

    nk2d, nv2d = pl.pallas_call(
        kernel,
        out_shape=(
            jax.ShapeDtypeStruct((rows, od), k_dtype),
            jax.ShapeDtypeStruct((rows, od), v_dtype),
        ),
        grid=grid,
        in_specs=[
            pl.BlockSpec((h, pd), lambda i: (0, 0)),          # key prefix (resident)
            pl.BlockSpec((h, pd), lambda i: (0, 0)),          # value prefix (resident)
            pl.BlockSpec((row_block, sd), lambda i: (i, 0)),  # key rows
            pl.BlockSpec((row_block, sd), lambda i: (i, 0)),  # value rows
        ],
        out_specs=(
            pl.BlockSpec((row_block, od), lambda i: (i, 0)),
            pl.BlockSpec((row_block, od), lambda i: (i, 0)),
        ),
        compiler_params=pltpu.CompilerParams(
            dimension_semantics=("parallel",),
            vmem_limit_bytes=vmem_limit,
        ),
    )(kp2d, vp2d, k2d, v2d)

    new_key = nk2d.reshape(B, h, P + S, D_h)
    new_value = nv2d.reshape(B, h, P + S, D_h)
    return new_key, new_value


if __name__ == "__main__":
    # Small shapes consistent with the module.
    B, h, S, D_h = 2, 4, 8, 16
    prefix_length = 4
    dim = h * D_h  # 64

    rng = jax.random.PRNGKey(0)
    r1, r2, r3, r4 = jax.random.split(rng, 4)
    key = jax.random.normal(r1, (B, h, S, D_h), dtype=jnp.float32)
    value = jax.random.normal(r2, (B, h, S, D_h), dtype=jnp.float32)
    # Deterministic "parameters" (torch.randn in __init__) -> jax.random.normal here.
    key_prefix = jax.random.normal(r3, (prefix_length * dim,), dtype=jnp.float32)
    value_prefix = jax.random.normal(r4, (prefix_length * dim,), dtype=jnp.float32)

    new_key, new_value = jax.block_until_ready(
        prefix_forward(key, value, key_prefix, value_prefix, prefix_length)
    )

    # Pure-JAX reference with the exact PyTorch semantics:
    # key_prefix.unsqueeze(0).expand(B, -1).view(B, h, P, D_h)
    kp_ref = jnp.broadcast_to(
        key_prefix.reshape(1, h, prefix_length, D_h), (B, h, prefix_length, D_h)
    )
    vp_ref = jnp.broadcast_to(
        value_prefix.reshape(1, h, prefix_length, D_h), (B, h, prefix_length, D_h)
    )
    ref_key = jnp.concatenate([kp_ref, key], axis=2)
    ref_value = jnp.concatenate([vp_ref, value], axis=2)

    assert new_key.shape == (B, h, prefix_length + S, D_h)
    assert new_value.shape == (B, h, prefix_length + S, D_h)
    assert jnp.array_equal(new_key, ref_key)
    assert jnp.array_equal(new_value, ref_value)

    print("KERNEL_OK")
</pallas_src>

<mosaic_0001>
module attributes {stable_mosaic.version = 11 : i64} {
  func.func @prefix_kernel(%arg0: i32, %arg1: memref<4x64xf32, #tpu.memory_space<vmem>>, %arg2: memref<4x64xf32, #tpu.memory_space<vmem>>, %arg3: memref<8x128xf32, #tpu.memory_space<vmem>>, %arg4: memref<8x128xf32, #tpu.memory_space<vmem>>, %arg5: memref<8x192xf32, #tpu.memory_space<vmem>>, %arg6: memref<8x192xf32, #tpu.memory_space<vmem>>) attributes {dimension_semantics = [#tpu.dimension_semantics<parallel>], iteration_bounds = array<i64: 1>, scalar_prefetch = 0 : i64, scratch_operands = 0 : i64, tpu.core_type = #tpu.core_type<tc>, window_params = [{pipeline_mode = #tpu.pipeline_mode<synchronous>, transform_indices = @transform_0, window_bounds = array<i64: 4, 64>}, {pipeline_mode = #tpu.pipeline_mode<synchronous>, transform_indices = @transform_1, window_bounds = array<i64: 4, 64>}, {transform_indices = @transform_2, window_bounds = array<i64: 8, 128>}, {transform_indices = @transform_3, window_bounds = array<i64: 8, 128>}, {transform_indices = @transform_4, window_bounds = array<i64: 8, 192>}, {transform_indices = @transform_5, window_bounds = array<i64: 8, 192>}]} {
    %c0 = arith.constant 0 : index
    %c0_0 = arith.constant 0 : index
    %0 = vector.load %arg1[%c0, %c0_0] : memref<4x64xf32, #tpu.memory_space<vmem>>, vector<4x64xf32>
    %c0_1 = arith.constant 0 : index
    %c0_2 = arith.constant 0 : index
    %1 = vector.load %arg2[%c0_1, %c0_2] : memref<4x64xf32, #tpu.memory_space<vmem>>, vector<4x64xf32>
    %2 = tpu.concatenate %0, %0 in 0 : vector<4x64xf32>, vector<4x64xf32> -> vector<8x64xf32>
    %3 = tpu.concatenate %1, %1 in 0 : vector<4x64xf32>, vector<4x64xf32> -> vector<8x64xf32>
    %c0_3 = arith.constant 0 : index
    %c0_4 = arith.constant 0 : index
    %4 = vector.load %arg3[%c0_3, %c0_4] : memref<8x128xf32, #tpu.memory_space<vmem>>, vector<8x128xf32>
    %5 = tpu.concatenate %2, %4 in 1 : vector<8x64xf32>, vector<8x128xf32> -> vector<8x192xf32>
    %c0_5 = arith.constant 0 : index
    %c0_6 = arith.constant 0 : index
    %6 = vector.load %arg5[%c0_5, %c0_6] : memref<8x192xf32, #tpu.memory_space<vmem>>, vector<8x192xf32>
    tpu.vector_store %arg5[%c0_5, %c0_6], %5 {strides = array<i32>} : memref<8x192xf32, #tpu.memory_space<vmem>>, vector<8x192xf32>,
    %c0_7 = arith.constant 0 : index
    %c0_8 = arith.constant 0 : index
    %7 = vector.load %arg4[%c0_7, %c0_8] : memref<8x128xf32, #tpu.memory_space<vmem>>, vector<8x128xf32>
    %8 = tpu.concatenate %3, %7 in 1 : vector<8x64xf32>, vector<8x128xf32> -> vector<8x192xf32>
    %c0_9 = arith.constant 0 : index
    %c0_10 = arith.constant 0 : index
    %9 = vector.load %arg6[%c0_9, %c0_10] : memref<8x192xf32, #tpu.memory_space<vmem>>, vector<8x192xf32>
    tpu.vector_store %arg6[%c0_9, %c0_10], %8 {strides = array<i32>} : memref<8x192xf32, #tpu.memory_space<vmem>>, vector<8x192xf32>,
    return
  }
  func.func @transform_0(%arg0: i32) -> (i32, i32) {
    %c0_i32 = arith.constant 0 : i32
    %c0_i32_0 = arith.constant 0 : i32
    %c0_i32_1 = arith.constant 0 : i32
    return %c0_i32, %c0_i32_0 : i32, i32
  }
  func.func @transform_1(%arg0: i32) -> (i32, i32) {
    %c0_i32 = arith.constant 0 : i32
    %c0_i32_0 = arith.constant 0 : i32
    %c0_i32_1 = arith.constant 0 : i32
    return %c0_i32, %c0_i32_0 : i32, i32
  }
  func.func @transform_2(%arg0: i32) -> (i32, i32) {
    %c0_i32 = arith.constant 0 : i32
    %c0_i32_0 = arith.constant 0 : i32
    return %arg0, %c0_i32 : i32, i32
  }
  func.func @transform_3(%arg0: i32) -> (i32, i32) {
    %c0_i32 = arith.constant 0 : i32
    %c0_i32_0 = arith.constant 0 : i32
    return %arg0, %c0_i32 : i32, i32
  }
  func.func @transform_4(%arg0: i32) -> (i32, i32) {
    %c0_i32 = arith.constant 0 : i32
    %c0_i32_0 = arith.constant 0 : i32
    return %arg0, %c0_i32 : i32, i32
  }
  func.func @transform_5(%arg0: i32) -> (i32, i32) {
    %c0_i32 = arith.constant 0 : i32
    %c0_i32_0 = arith.constant 0 : i32
    return %arg0, %c0_i32 : i32, i32
  }
}

</mosaic_0001>

<llo_original>
// kernel: tpu_custom_call.1
$region0: #{tpu_custom_call.1}
  #allocation0 [shape = 'u32[]', space=smem, size = 0x4, offset = 0x4, fixed_abs, tag = 'smem constant byte address 0x4 - core index']
  #allocation1 [shape = 'u32[144,128]{1,0:T(1,128)}', space=vmem, size = 0x12000, scoped, tag = 'internal scratch']
  %s0 = inlined_call_operand.hbm [shape: f32[4,64], index: 0, kind: input, shape index: {}]
  %s1 = inlined_call_operand.hbm [shape: f32[4,64], index: 1, kind: input, shape index: {}]
  %s2 = inlined_call_operand.hbm [shape: f32[8,128], index: 2, kind: input, shape index: {}]
  %s3 = inlined_call_operand.vmem [shape: f32[8,128], index: 3, kind: input, shape index: {}]
  %s4 = inlined_call_operand.hbm [shape: f32[8,192], index: 4, kind: output, shape index: {0}]
  %s5 = inlined_call_operand.hbm [shape: f32[8,192], index: 5, kind: output, shape index: {1}]
  %6 = xla_tuple %s4, %s5
  %s7 = sld [smem:[#allocation0]]
  $region46: #{tpu_custom_call.1} parent=0
    _
  %s9 = ssub.s32 1, %s7
  %s10 = scalar_select 0, %s9, %s7
  $region1: #{tpu_custom_call.1} parent=0
    #allocation2 [shape = 'u8[2048]{0}', space=vmem, size = 0x800, scoped, tag = 'input window, operand 0, single buffered']
    #allocation3 [shape = 's32[1]{0}', space=sflag, size = 0x4, scoped, tag = 'scoped memory for tpu_custom_call.1']
    #allocation4 [shape = 's32[1]{0}', space=sflag, size = 0x4, scoped, tag = 'scoped memory for tpu_custom_call.1']
    #allocation5 [shape = 'u8[2048]{0}', space=vmem, size = 0x800, scoped, tag = 'input window, operand 1, single buffered']
    #allocation6 [shape = 's32[1]{0}', space=sflag, size = 0x4, scoped, tag = 'scoped memory for tpu_custom_call.1']
    #allocation7 [shape = 'u8[4096]{0}', space=vmem, size = 0x1000, scoped, tag = 'input window, operand 2, single buffered']
    #allocation8 [shape = 'u8[8192]{0}', space=vmem, size = 0x2000, scoped, tag = 'output window, operand 0, single buffered']
    #allocation9 [shape = 'u8[8192]{0}', space=vmem, size = 0x2000, scoped, tag = 'output window, operand 1, single buffered']
    #allocation10 [shape = 's32[1]{0}', space=sflag, size = 0x4, scoped, tag = 'scoped memory for tpu_custom_call.1']
    %11 = vsyncpa [#allocation3], 0
    %12 = vsyncpa [#allocation6], 0
    %13 = vsyncpa [#allocation4], 0
    %14 = vsyncpa [#allocation10], 0
    // Predicated region
    $region2: #{tpu_custom_call.1} parent=1 // pred_check
      _
    $region3: #{tpu_custom_call.1} parent=1 // pred_check_branch
      %16 = sbr.rel (0) target = $region5
    $region4: #{tpu_custom_call.1} parent=1 // pred_region
      %s18 = ssub.s32 64, 64
      %19 = vsyncadd [#allocation3], %s18
      %s21 = sshll.u32 [#allocation2], 4
      %s22 = int_to_ptr.vmem [resolvable:$true] %s21
      %24 = dma.hbm_to_vmem [thread:$0]  %s0, 64, %s22, [#allocation3]
    $region5: #{tpu_custom_call.1} parent=1 // pred_fallthru
      _
    // Predicated region
    $region6: #{tpu_custom_call.1} parent=1 // pred_check
      _
    $region7: #{tpu_custom_call.1} parent=1 // pred_check_branch
      %26 = sbr.rel (0) target = $region9
    $region8: #{tpu_custom_call.1} parent=1 // pred_region
      %s28 = ssub.s32 64, 64
      %29 = vsyncadd [#allocation6], %s28
      %s31 = sshll.u32 [#allocation5], 4
      %s32 = int_to_ptr.vmem [resolvable:$true] %s31
      %34 = dma.hbm_to_vmem [thread:$0]  %s1, 64, %s32, [#allocation6]
    $region9: #{tpu_custom_call.1} parent=1 // pred_fallthru
      _
    // Predicated region
    $region10: #{tpu_custom_call.1} parent=1 // pred_check
      _
    $region11: #{tpu_custom_call.1} parent=1 // pred_check_branch
      %36 = sbr.rel (0) target = $region13
    $region12: #{tpu_custom_call.1} parent=1 // pred_region
      %s38 = ssub.s32 128, 128
      %39 = vsyncadd [#allocation6], %s38
      %s41 = sshll.u32 [#allocation7], 4
      %s42 = int_to_ptr.vmem [resolvable:$true] %s41
      %44 = dma.hbm_to_vmem [thread:$0]  %s2, 128, %s42, [#allocation6]
    $region13: #{tpu_custom_call.1} parent=1 // pred_fallthru
      _
    // Predicated region
    $region14: #{tpu_custom_call.1} parent=1 // pred_check
      _
    $region15: #{tpu_custom_call.1} parent=1 // pred_check_branch
      %46 = sbr.rel (0) target = $region17
    $region16: #{tpu_custom_call.1} parent=1 // pred_region
      _
    $region17: #{tpu_custom_call.1} parent=1 // pred_fallthru
      _
    // Predicated region
    $region18: #{tpu_custom_call.1} parent=1 // pred_check
      _
    $region19: #{tpu_custom_call.1} parent=1 // pred_check_branch
      %48 = sbr.rel (0) target = $region21
    $region20: #{tpu_custom_call.1} parent=1 // pred_region
      %49 = dma.done [#allocation3], 64
    $region21: #{tpu_custom_call.1} parent=1 // pred_fallthru
      _
    // Predicated region
    $region22: #{tpu_custom_call.1} parent=1 // pred_check
      _
    $region23: #{tpu_custom_call.1} parent=1 // pred_check_branch
      %51 = sbr.rel (0) target = $region25
    $region24: #{tpu_custom_call.1} parent=1 // pred_region
      %52 = dma.done [#allocation6], 64
    $region25: #{tpu_custom_call.1} parent=1 // pred_fallthru
      _
    // Predicated region
    $region26: #{tpu_custom_call.1} parent=1 // pred_check
      _
    $region27: #{tpu_custom_call.1} parent=1 // pred_check_branch
      %54 = sbr.rel (0) target = $region29
    $region28: #{tpu_custom_call.1} parent=1 // pred_region
      %55 = dma.done [#allocation6], 128
    $region29: #{tpu_custom_call.1} parent=1 // pred_fallthru
      _
    %v56 = vld [vmem:[#allocation2] sm:$0xf]
    %v57 = vld [vmem:[#allocation5] sm:$0xf]
    %v59 = vrot.slane %v56, 4
    %vm61 = vcmask 1043456
    %v62 = vsel %vm61, %v56, %v59
    %v64 = vrot.slane %v57, 4
    %v66 = vsel %vm61, %v57, %v64
    %v67 = vld [vmem:[#allocation7] sm:$0xff]
    %69 = vrot.lane.b32.xlu0 %v67, 64
    %v70 = vpop.permute.xlu0 %69
    %vm72 = vcmask 523264
    %v73 = vsel %vm72, %v62, %v70
    %74 = vst [vmem:[#allocation8] sm:$0xff] %v73
    %75 = vst.msk [vmem:[#allocation8 + $0x8] sm:$0xff] %vm72, %v70
    %v76 = vld [vmem:[%s3] sm:$0xff]
    %78 = vrot.lane.b32.xlu0 %v76, 64
    %v79 = vpop.permute.xlu0 %78
    %v81 = vsel %vm72, %v66, %v79
    %82 = vst [vmem:[#allocation9] sm:$0xff] %v81
    %83 = vst.msk [vmem:[#allocation9 + $0x8] sm:$0xff] %vm72, %v79
    // Predicated region
    $region30: #{tpu_custom_call.1} parent=1 // pred_check
      _
    $region31: #{tpu_custom_call.1} parent=1 // pred_check_branch
      %85 = sbr.rel (0) target = $region33
    $region32: #{tpu_custom_call.1} parent=1 // pred_region
      %s87 = ssub.s32 256, 256
      %88 = vsyncadd [#allocation4], %s87
      %s90 = sshll.u32 [#allocation8], 4
      %s91 = int_to_ptr.vmem [resolvable:$true] %s90
      %93 = dma.vmem_to_hbm [thread:$0]  %s91, 256, %s4, [#allocation4]
    $region33: #{tpu_custom_call.1} parent=1 // pred_fallthru
      _
    // Predicated region
    $region34: #{tpu_custom_call.1} parent=1 // pred_check
      _
    $region35: #{tpu_custom_call.1} parent=1 // pred_check_branch
      %95 = sbr.rel (0) target = $region37
    $region36: #{tpu_custom_call.1} parent=1 // pred_region
      %s97 = ssub.s32 256, 256
      %98 = vsyncadd [#allocation10], %s97
      %s100 = sshll.u32 [#allocation9], 4
      %s101 = int_to_ptr.vmem [resolvable:$true] %s100
      %103 = dma.vmem_to_hbm [thread:$0]  %s101, 256, %s5, [#allocation10]
    $region37: #{tpu_custom_call.1} parent=1 // pred_fallthru
      _
    // Predicated region
    $region38: #{tpu_custom_call.1} parent=1 // pred_check
      _
    $region39: #{tpu_custom_call.1} parent=1 // pred_check_branch
      %105 = sbr.rel (0) target = $region41
    $region40: #{tpu_custom_call.1} parent=1 // pred_region
      %106 = dma.done [#allocation4], 256
    $region41: #{tpu_custom_call.1} parent=1 // pred_fallthru
      _
    // Predicated region
    $region42: #{tpu_custom_call.1} parent=1 // pred_check
      _
    $region43: #{tpu_custom_call.1} parent=1 // pred_check_branch
      %108 = sbr.rel (0) target = $region45
    $region44: #{tpu_custom_call.1} parent=1 // pred_region
      %109 = dma.done [#allocation10], 256
    $region45: #{tpu_custom_call.1} parent=1 // pred_fallthru
      _
    %110 = vsyncpa [#allocation3], 1
    %111 = vsyncpa [#allocation6], 1
    %112 = vsyncpa [#allocation4], 1
    %113 = vsyncpa [#allocation10], 1

</llo_original>
